<compile_context>
chip_gen: v7x
topology: tpu7x:2x2x1
jax: 0.10.0
libtpu: 0.0.40
codegen_flags: <defaults>
</compile_context>

<pallas_src>
import jax
import jax.numpy as jnp
from jax.experimental import pallas as pl
from jax.experimental.pallas import tpu as pltpu

LANES = 128            # vreg lane width: last dim of the slab
ROW_ALIGN = 32         # bool/int8 outputs pack as (32, 128) sublane tiles
TARGET_MIN_STEPS = 4   # aim for >=4 grid steps (v7x megacore sharding)


def _elementwise_kernel(x_ref,
                        add_ref, sub_ref, mul_ref, div_ref,
                        gt_ref, lt_ref, eq_ref):
    x = x_ref[...]
    add_ref[...] = x + 5.0
    sub_ref[...] = x - 3.0
    mul_ref[...] = x * 2.0
    div_ref[...] = x * 0.25          # bit-exact with x / 4 (power-of-two)
    gt_ref[...] = x > 2.0            # bool masks stored directly from kernel
    lt_ref[...] = x < 1.0
    eq_ref[...] = x == 0.0


def _round_up(a, b):
    return ((a + b - 1) // b) * b


def _generation_tiling():
    """Pick (max_tile_rows, vmem_limit_bytes) from the physical VMEM size."""
    vmem_bytes = 64 * 1024 * 1024
    try:
        info = pltpu.get_tpu_info()
        vmem_bytes = int(getattr(info, "vmem_capacity_bytes", vmem_bytes))
    except Exception:
        pass
    if vmem_bytes >= 100 * 1024 * 1024:
        # v5e / v6e: 128 MiB physical VMEM.  8192-row tile ~= 23 MiB/step,
        # ~46 MiB double-buffered -> safe under a 64 MiB scoped limit.
        return 8192, 64 * 1024 * 1024
    # v7x: 64 MiB VMEM per TensorCore.  4096-row tile ~= 11.5 MiB/step,
    # ~23 MiB double-buffered -> comfortable headroom for compiler scratch.
    return 4096, 40 * 1024 * 1024


def pt_module_forward(x):
    """Reproduces PtModule.forward for a float NCHW tensor."""
    orig_shape = x.shape
    n = x.size

    # ---- lane-dense layout: (rows, 128) ----
    rows = pl.cdiv(n, LANES)
    padded_n = rows * LANES

    flat = x.reshape(-1)
    if padded_n != n:
        # Only when n is not a multiple of 128; pads by < 128 elements.
        flat = jnp.pad(flat, (0, padded_n - n))
    x2d = flat.reshape(rows, LANES)

    # ---- row tile: multiple of 32, capped per generation, >= TARGET steps ----
    cap_rows, vmem_limit = _generation_tiling()
    tile_r = _round_up(pl.cdiv(rows, TARGET_MIN_STEPS), ROW_ALIGN)
    tile_r = min(tile_r, cap_rows)
    if tile_r >= rows:
        tile_r = rows                 # single full-array block (always legal)
    grid = (pl.cdiv(rows, tile_r),)   # ragged last block handled by Pallas

    spec = pl.BlockSpec((tile_r, LANES), lambda i: (i, 0))
    float_shape = jax.ShapeDtypeStruct((rows, LANES), x.dtype)
    mask_shape = jax.ShapeDtypeStruct((rows, LANES), jnp.bool_)

    # Pure HBM-bandwidth-bound kernel: 4 B read + 19 B written per element.
    cost = pl.CostEstimate(flops=7 * padded_n,
                           transcendentals=0,
                           bytes_accessed=23 * padded_n)

    outs = pl.pallas_call(
        _elementwise_kernel,
        out_shape=(float_shape, float_shape, float_shape, float_shape,
                   mask_shape, mask_shape, mask_shape),
        grid=grid,
        in_specs=[spec],
        out_specs=(spec, spec, spec, spec, spec, spec, spec),
        compiler_params=pltpu.CompilerParams(
            dimension_semantics=("parallel",),   # shards steps across v7x TCs
            vmem_limit_bytes=vmem_limit,
        ),
        cost_estimate=cost,
    )(x2d)

    def _unshape(a):
        a = a.reshape(-1)
        if padded_n != n:
            a = a[:n]
        return a.reshape(orig_shape)

    return tuple(_unshape(o) for o in outs)


if __name__ == "__main__":
    key = jax.random.PRNGKey(0)
    # NCHW input, small shape: batch=2, channels=4, spatial=16x16
    x = jax.random.normal(key, (2, 4, 16, 16), dtype=jnp.float32)
    # make sure the eq-to-zero branch is exercised
    x = x.at[0, 0, 0, 0].set(0.0)

    outs = pt_module_forward(x)
    outs = jax.block_until_ready(outs)

    # correctness check against plain JAX reference
    refs = (x + 5, x - 3, x * 2, x / 4, x > 2, x < 1, x == 0)
    for got, ref in zip(outs, refs):
        assert got.shape == ref.shape, (got.shape, ref.shape)
        assert got.dtype == ref.dtype, (got.dtype, ref.dtype)
        if got.dtype == jnp.bool_:
            assert jnp.array_equal(got, ref)
        else:
            assert jnp.allclose(got, ref)

    print("KERNEL_OK")
</pallas_src>

<mosaic_0001>
module attributes {stable_mosaic.version = 11 : i64} {
  func.func @_elementwise_kernel(%arg0: i32, %arg1: memref<16x128xf32, #tpu.memory_space<vmem>>, %arg2: memref<16x128xf32, #tpu.memory_space<vmem>>, %arg3: memref<16x128xf32, #tpu.memory_space<vmem>>, %arg4: memref<16x128xf32, #tpu.memory_space<vmem>>, %arg5: memref<16x128xf32, #tpu.memory_space<vmem>>, %arg6: memref<16x128xi32, #tpu.memory_space<vmem>>, %arg7: memref<16x128xi32, #tpu.memory_space<vmem>>, %arg8: memref<16x128xi32, #tpu.memory_space<vmem>>) attributes {dimension_semantics = [#tpu.dimension_semantics<parallel>], iteration_bounds = array<i64: 1>, scalar_prefetch = 0 : i64, scratch_operands = 0 : i64, tpu.core_type = #tpu.core_type<tc>, window_params = [{transform_indices = @transform_0, window_bounds = array<i64: 16, 128>}, {transform_indices = @transform_1, window_bounds = array<i64: 16, 128>}, {transform_indices = @transform_2, window_bounds = array<i64: 16, 128>}, {transform_indices = @transform_3, window_bounds = array<i64: 16, 128>}, {transform_indices = @transform_4, window_bounds = array<i64: 16, 128>}, {transform_indices = @transform_5, window_bounds = array<i64: 16, 128>}, {transform_indices = @transform_6, window_bounds = array<i64: 16, 128>}, {transform_indices = @transform_7, window_bounds = array<i64: 16, 128>}]} {
    %c0 = arith.constant 0 : index
    %c0_0 = arith.constant 0 : index
    %0 = vector.load %arg1[%c0, %c0_0] : memref<16x128xf32, #tpu.memory_space<vmem>>, vector<16x128xf32>
    %cst = arith.constant 5.000000e+00 : f32
    %1 = vector.broadcast %cst : f32 to vector<16x128xf32>
    %2 = arith.addf %0, %1 : vector<16x128xf32>
    %c0_1 = arith.constant 0 : index
    %c0_2 = arith.constant 0 : index
    %3 = vector.load %arg2[%c0_1, %c0_2] : memref<16x128xf32, #tpu.memory_space<vmem>>, vector<16x128xf32>
    tpu.vector_store %arg2[%c0_1, %c0_2], %2 {strides = array<i32>} : memref<16x128xf32, #tpu.memory_space<vmem>>, vector<16x128xf32>,
    %cst_3 = arith.constant 3.000000e+00 : f32
    %4 = vector.broadcast %cst_3 : f32 to vector<16x128xf32>
    %5 = arith.subf %0, %4 : vector<16x128xf32>
    %c0_4 = arith.constant 0 : index
    %c0_5 = arith.constant 0 : index
    %6 = vector.load %arg3[%c0_4, %c0_5] : memref<16x128xf32, #tpu.memory_space<vmem>>, vector<16x128xf32>
    tpu.vector_store %arg3[%c0_4, %c0_5], %5 {strides = array<i32>} : memref<16x128xf32, #tpu.memory_space<vmem>>, vector<16x128xf32>,
    %cst_6 = arith.constant 2.000000e+00 : f32
    %7 = vector.broadcast %cst_6 : f32 to vector<16x128xf32>
    %8 = arith.mulf %0, %7 : vector<16x128xf32>
    %c0_7 = arith.constant 0 : index
    %c0_8 = arith.constant 0 : index
    %9 = vector.load %arg4[%c0_7, %c0_8] : memref<16x128xf32, #tpu.memory_space<vmem>>, vector<16x128xf32>
    tpu.vector_store %arg4[%c0_7, %c0_8], %8 {strides = array<i32>} : memref<16x128xf32, #tpu.memory_space<vmem>>, vector<16x128xf32>,
    %cst_9 = arith.constant 2.500000e-01 : f32
    %10 = vector.broadcast %cst_9 : f32 to vector<16x128xf32>
    %11 = arith.mulf %0, %10 : vector<16x128xf32>
    %c0_10 = arith.constant 0 : index
    %c0_11 = arith.constant 0 : index
    %12 = vector.load %arg5[%c0_10, %c0_11] : memref<16x128xf32, #tpu.memory_space<vmem>>, vector<16x128xf32>
    tpu.vector_store %arg5[%c0_10, %c0_11], %11 {strides = array<i32>} : memref<16x128xf32, #tpu.memory_space<vmem>>, vector<16x128xf32>,
    %cst_12 = arith.constant 2.000000e+00 : f32
    %13 = vector.broadcast %cst_12 : f32 to vector<16x128xf32>
    %14 = arith.cmpf ogt, %0, %13 : vector<16x128xf32>
    %c0_13 = arith.constant 0 : index
    %c0_14 = arith.constant 0 : index
    %15 = vector.load %arg6[%c0_13, %c0_14] : memref<16x128xi32, #tpu.memory_space<vmem>>, vector<16x128xi32>
    %16 = arith.extui %14 : vector<16x128xi1> to vector<16x128xi32>
    %cst_15 = arith.constant dense<0> : vector<16x128xi32>
    %17 = arith.cmpi ne, %15, %cst_15 : vector<16x128xi32>
    tpu.vector_store %arg6[%c0_13, %c0_14], %16 {strides = array<i32>} : memref<16x128xi32, #tpu.memory_space<vmem>>, vector<16x128xi32>,
    %cst_16 = arith.constant 1.000000e+00 : f32
    %18 = vector.broadcast %cst_16 : f32 to vector<16x128xf32>
    %19 = arith.cmpf olt, %0, %18 : vector<16x128xf32>
    %c0_17 = arith.constant 0 : index
    %c0_18 = arith.constant 0 : index
    %20 = vector.load %arg7[%c0_17, %c0_18] : memref<16x128xi32, #tpu.memory_space<vmem>>, vector<16x128xi32>
    %21 = arith.extui %19 : vector<16x128xi1> to vector<16x128xi32>
    %cst_19 = arith.constant dense<0> : vector<16x128xi32>
    %22 = arith.cmpi ne, %20, %cst_19 : vector<16x128xi32>
    tpu.vector_store %arg7[%c0_17, %c0_18], %21 {strides = array<i32>} : memref<16x128xi32, #tpu.memory_space<vmem>>, vector<16x128xi32>,
    %cst_20 = arith.constant 0.000000e+00 : f32
    %23 = vector.broadcast %cst_20 : f32 to vector<16x128xf32>
    %24 = arith.cmpf oeq, %0, %23 : vector<16x128xf32>
    %c0_21 = arith.constant 0 : index
    %c0_22 = arith.constant 0 : index
    %25 = vector.load %arg8[%c0_21, %c0_22] : memref<16x128xi32, #tpu.memory_space<vmem>>, vector<16x128xi32>
    %26 = arith.extui %24 : vector<16x128xi1> to vector<16x128xi32>
    %cst_23 = arith.constant dense<0> : vector<16x128xi32>
    %27 = arith.cmpi ne, %25, %cst_23 : vector<16x128xi32>
    tpu.vector_store %arg8[%c0_21, %c0_22], %26 {strides = array<i32>} : memref<16x128xi32, #tpu.memory_space<vmem>>, vector<16x128xi32>,
    return
  }
  func.func @transform_0(%arg0: i32) -> (i32, i32) {
    %c0_i32 = arith.constant 0 : i32
    %c0_i32_0 = arith.constant 0 : i32
    return %arg0, %c0_i32 : i32, i32
  }
  func.func @transform_1(%arg0: i32) -> (i32, i32) {
    %c0_i32 = arith.constant 0 : i32
    %c0_i32_0 = arith.constant 0 : i32
    return %arg0, %c0_i32 : i32, i32
  }
  func.func @transform_2(%arg0: i32) -> (i32, i32) {
    %c0_i32 = arith.constant 0 : i32
    %c0_i32_0 = arith.constant 0 : i32
    return %arg0, %c0_i32 : i32, i32
  }
  func.func @transform_3(%arg0: i32) -> (i32, i32) {
    %c0_i32 = arith.constant 0 : i32
    %c0_i32_0 = arith.constant 0 : i32
    return %arg0, %c0_i32 : i32, i32
  }
  func.func @transform_4(%arg0: i32) -> (i32, i32) {
    %c0_i32 = arith.constant 0 : i32
    %c0_i32_0 = arith.constant 0 : i32
    return %arg0, %c0_i32 : i32, i32
  }
  func.func @transform_5(%arg0: i32) -> (i32, i32) {
    %c0_i32 = arith.constant 0 : i32
    %c0_i32_0 = arith.constant 0 : i32
    return %arg0, %c0_i32 : i32, i32
  }
  func.func @transform_6(%arg0: i32) -> (i32, i32) {
    %c0_i32 = arith.constant 0 : i32
    %c0_i32_0 = arith.constant 0 : i32
    return %arg0, %c0_i32 : i32, i32
  }
  func.func @transform_7(%arg0: i32) -> (i32, i32) {
    %c0_i32 = arith.constant 0 : i32
    %c0_i32_0 = arith.constant 0 : i32
    return %arg0, %c0_i32 : i32, i32
  }
}

</mosaic_0001>

<llo_original>
// kernel: tpu_custom_call.1
$region0: #{tpu_custom_call.1}
  #allocation0 [shape = 'u32[]', space=smem, size = 0x4, offset = 0x4, fixed_abs, tag = 'smem constant byte address 0x4 - core index']
  #allocation1 [shape = 'u32[144,128]{1,0:T(1,128)}', space=vmem, size = 0x12000, scoped, tag = 'internal scratch']
  %s0 = inlined_call_operand.hbm [shape: f32[16,128], index: 0, kind: input, shape index: {}]
  %s1 = inlined_call_operand.hbm [shape: f32[16,128], index: 1, kind: output, shape index: {0}]
  %s2 = inlined_call_operand.hbm [shape: f32[16,128], index: 2, kind: output, shape index: {1}]
  %s3 = inlined_call_operand.hbm [shape: f32[16,128], index: 3, kind: output, shape index: {2}]
  %s4 = inlined_call_operand.hbm [shape: f32[16,128], index: 4, kind: output, shape index: {3}]
  %s5 = inlined_call_operand.vmem [shape: s32[16,128], index: 5, kind: output, shape index: {4}]
  %s6 = inlined_call_operand.vmem [shape: s32[16,128], index: 6, kind: output, shape index: {5}]
  %s7 = inlined_call_operand.vmem [shape: s32[16,128], index: 7, kind: output, shape index: {6}]
  %8 = xla_tuple %s1, %s2, %s3, %s4, %s5, %s6, %s7
  %s9 = sld [smem:[#allocation0]]
  $region66: #{tpu_custom_call.1} parent=0
    _
  %s11 = ssub.s32 1, %s9
  %s12 = scalar_select 0, %s11, %s9
  $region1: #{tpu_custom_call.1} parent=0
    #allocation2 [shape = 'u8[8192]{0}', space=vmem, size = 0x2000, scoped, tag = 'input window, operand 0, single buffered']
    #allocation3 [shape = 's32[1]{0}', space=sflag, size = 0x4, scoped, tag = 'scoped memory for tpu_custom_call.1']
    #allocation4 [shape = 's32[1]{0}', space=sflag, size = 0x4, scoped, tag = 'scoped memory for tpu_custom_call.1']
    #allocation5 [shape = 'u8[8192]{0}', space=vmem, size = 0x2000, scoped, tag = 'output window, operand 0, single buffered']
    #allocation6 [shape = 'u8[8192]{0}', space=vmem, size = 0x2000, scoped, tag = 'output window, operand 1, single buffered']
    #allocation7 [shape = 's32[1]{0}', space=sflag, size = 0x4, scoped, tag = 'scoped memory for tpu_custom_call.1']
    #allocation8 [shape = 'u8[8192]{0}', space=vmem, size = 0x2000, scoped, tag = 'output window, operand 2, single buffered']
    #allocation9 [shape = 'u8[8192]{0}', space=vmem, size = 0x2000, scoped, tag = 'output window, operand 3, single buffered']
    #allocation10 [shape = 's32[1]{0}', space=sflag, size = 0x4, scoped, tag = 'scoped memory for tpu_custom_call.1']
    %13 = vsyncpa [#allocation3], 0
    %14 = vsyncpa [#allocation4], 0
    %15 = vsyncpa [#allocation7], 0
    %16 = vsyncpa [#allocation10], 0
    // Predicated region
    $region2: #{tpu_custom_call.1} parent=1 // pred_check
      _
    $region3: #{tpu_custom_call.1} parent=1 // pred_check_branch
      %18 = sbr.rel (0) target = $region5
    $region4: #{tpu_custom_call.1} parent=1 // pred_region
      %s20 = ssub.s32 256, 256
      %21 = vsyncadd [#allocation3], %s20
      %s22 = sshll.u32 [#allocation2], 4
      %s23 = int_to_ptr.vmem [resolvable:$true] %s22
      %28 = dma.hbm_to_vmem [thread:$0]  %s0, 256, %s23, [#allocation3], 128, 128, 8
    $region5: #{tpu_custom_call.1} parent=1 // pred_fallthru
      _
    // Predicated region
    $region6: #{tpu_custom_call.1} parent=1 // pred_check
      _
    $region7: #{tpu_custom_call.1} parent=1 // pred_check_branch
      %30 = sbr.rel (0) target = $region9
    $region8: #{tpu_custom_call.1} parent=1 // pred_region
      %31 = dma.done [#allocation3], 256
    $region9: #{tpu_custom_call.1} parent=1 // pred_fallthru
      _
    %v32 = vld [vmem:[#allocation2] sm:$0xff]
    %v33 = vld [vmem:[#allocation2 + $0x8] sm:$0xff]
    %v34 = vadd.f32 %v32, 5.0
    %v35 = vadd.f32 %v33, 5.0
    %36 = vst [vmem:[#allocation5] sm:$0xff] %v34
    %37 = vst [vmem:[#allocation5 + $0x8] sm:$0xff] %v35
    %v38 = vsub.f32 %v32, 3.0
    %v39 = vsub.f32 %v33, 3.0
    %40 = vst [vmem:[#allocation6] sm:$0xff] %v38
    %41 = vst [vmem:[#allocation6 + $0x8] sm:$0xff] %v39
    %v42 = vmul.f32 %v32, 2.0
    %v43 = vmul.f32 %v33, 2.0
    %44 = vst [vmem:[#allocation8] sm:$0xff] %v42
    %45 = vst [vmem:[#allocation8 + $0x8] sm:$0xff] %v43
    %v46 = vmul.f32 %v32, 0.25
    %v47 = vmul.f32 %v33, 0.25
    %48 = vst [vmem:[#allocation9] sm:$0xff] %v46
    %49 = vst [vmem:[#allocation9 + $0x8] sm:$0xff] %v47
    %vm50 = vcmp.gt.f32.partialorder %v32, 2.0
    %vm51 = vcmp.gt.f32.partialorder %v33, 2.0
    %v52 = vsel %vm50, 1, 0
    %v53 = vsel %vm51, 1, 0
    %54 = vst [vmem:[%s5] sm:$0xff] %v52
    %55 = vst [vmem:[%s5 + $0x8] sm:$0xff] %v53
    %vm56 = vcmp.lt.f32.partialorder %v32, 1.0
    %vm57 = vcmp.lt.f32.partialorder %v33, 1.0
    %v58 = vsel %vm56, 1, 0
    %v59 = vsel %vm57, 1, 0
    %60 = vst [vmem:[%s6] sm:$0xff] %v58
    %61 = vst [vmem:[%s6 + $0x8] sm:$0xff] %v59
    %vm62 = vcmp.eq.f32.partialorder %v32, 0.0
    %vm63 = vcmp.eq.f32.partialorder %v33, 0.0
    %v64 = vsel %vm62, 1, 0
    %v65 = vsel %vm63, 1, 0
    %66 = vst [vmem:[%s7] sm:$0xff] %v64
    %67 = vst [vmem:[%s7 + $0x8] sm:$0xff] %v65
    // Predicated region
    $region10: #{tpu_custom_call.1} parent=1 // pred_check
      _
    $region11: #{tpu_custom_call.1} parent=1 // pred_check_branch
      %69 = sbr.rel (0) target = $region13
    $region12: #{tpu_custom_call.1} parent=1 // pred_region
      %s71 = ssub.s32 256, 256
      %72 = vsyncadd [#allocation4], %s71
      %s73 = sshll.u32 [#allocation5], 4
      %s74 = int_to_ptr.vmem [resolvable:$true] %s73
      %79 = dma.vmem_to_hbm [thread:$0]  %s74, 256, %s1, [#allocation4], 128, 128, 8
    $region13: #{tpu_custom_call.1} parent=1 // pred_fallthru
      _
    // Predicated region
    $region14: #{tpu_custom_call.1} parent=1 // pred_check
      _
    $region15: #{tpu_custom_call.1} parent=1 // pred_check_branch
      %81 = sbr.rel (0) target = $region17
    $region16: #{tpu_custom_call.1} parent=1 // pred_region
      %s83 = ssub.s32 256, 256
      %84 = vsyncadd [#allocation7], %s83
      %s85 = sshll.u32 [#allocation6], 4
      %s86 = int_to_ptr.vmem [resolvable:$true] %s85
      %91 = dma.vmem_to_hbm [thread:$0]  %s86, 256, %s2, [#allocation7], 128, 128, 8
    $region17: #{tpu_custom_call.1} parent=1 // pred_fallthru
      _
    // Predicated region
    $region18: #{tpu_custom_call.1} parent=1 // pred_check
      _
    $region19: #{tpu_custom_call.1} parent=1 // pred_check_branch
      %93 = sbr.rel (0) target = $region21
    $region20: #{tpu_custom_call.1} parent=1 // pred_region
      %s95 = ssub.s32 256, 256
      %96 = vsyncadd [#allocation7], %s95
      %s97 = sshll.u32 [#allocation8], 4
      %s98 = int_to_ptr.vmem [resolvable:$true] %s97
      %103 = dma.vmem_to_hbm [thread:$0]  %s98, 256, %s3, [#allocation7], 128, 128, 8
    $region21: #{tpu_custom_call.1} parent=1 // pred_fallthru
      _
    // Predicated region
    $region22: #{tpu_custom_call.1} parent=1 // pred_check
      _
    $region23: #{tpu_custom_call.1} parent=1 // pred_check_branch
      %105 = sbr.rel (0) target = $region25
    $region24: #{tpu_custom_call.1} parent=1 // pred_region
      %s107 = ssub.s32 256, 256
      %108 = vsyncadd [#allocation10], %s107
      %s109 = sshll.u32 [#allocation9], 4
      %s110 = int_to_ptr.vmem [resolvable:$true] %s109
      %115 = dma.vmem_to_hbm [thread:$0]  %s110, 256, %s4, [#allocation10], 128, 128, 8
    $region25: #{tpu_custom_call.1} parent=1 // pred_fallthru
      _
    // Predicated region
    $region26: #{tpu_custom_call.1} parent=1 // pred_check
      _
    $region27: #{tpu_custom_call.1} parent=1 // pred_check_branch
      %117 = sbr.rel (0) target = $region29
    $region28: #{tpu_custom_call.1} parent=1 // pred_region
      _
    $region29: #{tpu_custom_call.1} parent=1 // pred_fallthru
      _
    // Predicated region
    $region30: #{tpu_custom_call.1} parent=1 // pred_check
      _
    $region31: #{tpu_custom_call.1} parent=1 // pred_check_branch
      %119 = sbr.rel (0) target = $region33
    $region32: #{tpu_custom_call.1} parent=1 // pred_region
      _
    $region33: #{tpu_custom_call.1} parent=1 // pred_fallthru
      _
    // Predicated region
    $region34: #{tpu_custom_call.1} parent=1 // pred_check
      _
    $region35: #{tpu_custom_call.1} parent=1 // pred_check_branch
      %121 = sbr.rel (0) target = $region37
    $region36: #{tpu_custom_call.1} parent=1 // pred_region
      _
    $region37: #{tpu_custom_call.1} parent=1 // pred_fallthru
      _
    // Predicated region
    $region38: #{tpu_custom_call.1} parent=1 // pred_check
      _
    $region39: #{tpu_custom_call.1} parent=1 // pred_check_branch
      %123 = sbr.rel (0) target = $region41
    $region40: #{tpu_custom_call.1} parent=1 // pred_region
      %124 = dma.done [#allocation4], 256
    $region41: #{tpu_custom_call.1} parent=1 // pred_fallthru
      _
    // Predicated region
    $region42: #{tpu_custom_call.1} parent=1 // pred_check
      _
    $region43: #{tpu_custom_call.1} parent=1 // pred_check_branch
      %126 = sbr.rel (0) target = $region45
    $region44: #{tpu_custom_call.1} parent=1 // pred_region
      %127 = dma.done [#allocation7], 256
    $region45: #{tpu_custom_call.1} parent=1 // pred_fallthru
      _
    // Predicated region
    $region46: #{tpu_custom_call.1} parent=1 // pred_check
      _
    $region47: #{tpu_custom_call.1} parent=1 // pred_check_branch
      %129 = sbr.rel (0) target = $region49
    $region48: #{tpu_custom_call.1} parent=1 // pred_region
      %130 = dma.done [#allocation7], 256
    $region49: #{tpu_custom_call.1} parent=1 // pred_fallthru
      _
    // Predicated region
    $region50: #{tpu_custom_call.1} parent=1 // pred_check
      _
    $region51: #{tpu_custom_call.1} parent=1 // pred_check_branch
      %132 = sbr.rel (0) target = $region53
    $region52: #{tpu_custom_call.1} parent=1 // pred_region
      %133 = dma.done [#allocation10], 256
    $region53: #{tpu_custom_call.1} parent=1 // pred_fallthru
      _
    // Predicated region
    $region54: #{tpu_custom_call.1} parent=1 // pred_check
      _
    $region55: #{tpu_custom_call.1} parent=1 // pred_check_branch
      %135 = sbr.rel (0) target = $region57
    $region56: #{tpu_custom_call.1} parent=1 // pred_region
      _
    $region57: #{tpu_custom_call.1} parent=1 // pred_fallthru
      _
    // Predicated region
    $region58: #{tpu_custom_call.1} parent=1 // pred_check
      _
    $region59: #{tpu_custom_call.1} parent=1 // pred_check_branch
      %137 = sbr.rel (0) target = $region61
    $region60: #{tpu_custom_call.1} parent=1 // pred_region
      _
    $region61: #{tpu_custom_call.1} parent=1 // pred_fallthru
      _
    // Predicated region
    $region62: #{tpu_custom_call.1} parent=1 // pred_check
      _
    $region63: #{tpu_custom_call.1} parent=1 // pred_check_branch
      %139 = sbr.rel (0) target = $region65
    $region64: #{tpu_custom_call.1} parent=1 // pred_region
      _
    $region65: #{tpu_custom_call.1} parent=1 // pred_fallthru
      _
    %140 = vsyncpa [#allocation3], 1
    %141 = vsyncpa [#allocation4], 1
    %142 = vsyncpa [#allocation7], 1
    %143 = vsyncpa [#allocation10], 1

</llo_original>
